<compile_context>
chip_gen: v7x
topology: tpu7x:2x2x1
jax: 0.10.0
libtpu: 0.0.40
codegen_flags: <defaults>
</compile_context>

<pallas_src>
import math

import jax
import jax.numpy as jnp
from jax import lax
from jax.experimental import pallas as pl
from jax.experimental.pallas import tpu as pltpu


# ----------------------------------------------------------------------------
# Helpers
# ----------------------------------------------------------------------------
def _vmem_limit_bytes():
    # Default scoped VMEM limit (16-32 MiB) is too small once projection weights are kept
    # resident; request ~70% of physical capacity (leaves headroom on v7x's 64 MiB).
    try:
        return int(pltpu.get_tpu_info().vmem_capacity_bytes * 0.7)
    except Exception:
        return None


def _compiler_params(dims):
    return pltpu.CompilerParams(dimension_semantics=dims,
                                vmem_limit_bytes=_vmem_limit_bytes())


def _pick_col_tile(d_out, target=512, align=128):
    """Column tile for the projection weight: full width if small, otherwise the largest
    multiple of 128 (<= target) dividing d_out, so the weight tile double-buffers on v7x."""
    if d_out <= target or d_out % align != 0:
        return d_out
    t = (target // align) * align
    while t >= align:
        if d_out % t == 0:
            return t
        t -= align
    return d_out


# ----------------------------------------------------------------------------
# Kernel 1: QKV projection (scale pre-folded into the Q weight).
# ----------------------------------------------------------------------------
def _qkv_kernel(x_ref, w_ref, out_ref):
    # x_ref: (1, block, d_in); w_ref: (1, d_in, ctile); out_ref: (1, 1, block, ctile)
    out_ref[0, 0] = jnp.dot(
        x_ref[0], w_ref[0], preferred_element_type=jnp.float32
    ).astype(out_ref.dtype)


# ----------------------------------------------------------------------------
# Kernel 2: flash causal attention over the flattened triangle + fused output projection.
# ----------------------------------------------------------------------------
def _make_flash_kernel(num_heads, head_dim, block, seq_len, seq_pad):
    def flash_kernel(qi_ref, ki_ref, q_ref, k_ref, v_ref, wo_ref, bo_ref, o_ref,
                     m_ref, l_ref, acc_ref):
        step = pl.program_id(1)
        qi = qi_ref[step]
        ki = ki_ref[step]

        @pl.when(ki == 0)          # first kv block of each q-row group
        def _init():
            m_ref[...] = jnp.full(m_ref.shape, -jnp.inf, dtype=m_ref.dtype)
            l_ref[...] = jnp.zeros(l_ref.shape, dtype=l_ref.dtype)
            acc_ref[...] = jnp.zeros(acc_ref.shape, dtype=acc_ref.dtype)

        def attend(on_diagonal):
            if on_diagonal:
                rows = lax.broadcasted_iota(jnp.int32, (block, block), 0)
                cols = lax.broadcasted_iota(jnp.int32, (block, block), 1)
                mask = cols > rows
                if seq_pad != seq_len:
                    # Invariant: padded keys live only in the last kv block, which under
                    # causality is only ever visited as a diagonal block -> masking padded
                    # keys here (and only here) is sufficient.
                    mask = jnp.logical_or(mask, ki * block + cols >= seq_len)
            # One head per iteration bounds vreg pressure (s/p are (block, block) f32).
            for h in range(num_heads):
                lo = h * head_dim
                qh = q_ref[0, 0, :, lo:lo + head_dim]          # (block, hd)
                kh = k_ref[0, 0, :, lo:lo + head_dim]
                vh = v_ref[0, 0, :, lo:lo + head_dim]
                # QK^T without explicit transpose (contract over head_dim).
                s = lax.dot_general(qh, kh, (((1,), (1,)), ((), ())),
                                    preferred_element_type=jnp.float32)   # (block, block)
                if on_diagonal:
                    s = jnp.where(mask, -jnp.inf, s)
                m_prev = m_ref[h]                                           # (block, 1)
                m_new = jnp.maximum(m_prev, jnp.max(s, axis=-1, keepdims=True))
                alpha = jnp.exp(m_prev - m_new)
                p = jnp.exp(s - m_new)                                      # unnormalized
                l_ref[h] = alpha * l_ref[h] + jnp.sum(p, axis=-1, keepdims=True)
                pv = jnp.dot(p.astype(vh.dtype), vh, preferred_element_type=jnp.float32)
                acc_ref[:, lo:lo + head_dim] = alpha * acc_ref[:, lo:lo + head_dim] + pv
                m_ref[h] = m_new

        @pl.when(ki < qi)          # off-diagonal: no mask work at all
        def _off_diag():
            attend(False)

        @pl.when(ki == qi)         # diagonal block: mask, then finalize this q-row group
        def _diag_and_finalize():
            attend(True)
            inv_l = pl.reciprocal(l_ref[...], approx=True)     # (H, block, 1), EUP slot
            for h in range(num_heads):
                lo = h * head_dim
                acc_ref[:, lo:lo + head_dim] = acc_ref[:, lo:lo + head_dim] * inv_l[h]
            out = jnp.dot(acc_ref[...].astype(wo_ref.dtype), wo_ref[...],
                          preferred_element_type=jnp.float32)
            out = out + bo_ref[...]
            o_ref[0] = out.astype(o_ref.dtype)

    return flash_kernel


# ----------------------------------------------------------------------------
# Wrapper
# ----------------------------------------------------------------------------
def custom_mha_pallas(x, wq, wk, wv, wo, bo, num_heads, *, block=None):
    """Causal MHA matching CustomMultiHeadAttention.forward (eval mode).

    x: (B, T, d_in); wq/wk/wv: (d_in, d_out); wo: (d_out, d_out); bo: (d_out,).
    For best TPU performance d_in / d_out should be multiples of 128 and inputs bf16;
    arbitrary sizes / f32 still run correctly.
    """
    B, T, d_in = x.shape
    d_out = wq.shape[1]
    assert d_out % num_heads == 0
    head_dim = d_out // num_heads
    scale = 1.0 / math.sqrt(head_dim)
    dtype = x.dtype

    # Token tile (multiple of 8); pad T up to a multiple of it.
    if block is None:
        block = 128   # good default on v5e; 256 can help on v6e/v7x with further kv sub-tiling
    block = ((min(block, T) + 7) // 8) * 8
    n_blk = (T + block - 1) // block
    T_pad = n_blk * block
    if T_pad != T:
        x = jnp.pad(x, ((0, 0), (0, T_pad - T), (0, 0)))

    # ---- QKV projection: stacked weights, scale folded into Q -----------------
    w_stack = jnp.stack([wq * scale, wk, wv], axis=0).astype(dtype)    # (3, d_in, d_out)
    ctile = _pick_col_tile(d_out)
    n_ct = d_out // ctile

    qkv = pl.pallas_call(
        _qkv_kernel,
        out_shape=jax.ShapeDtypeStruct((3, B, T_pad, d_out), dtype),
        grid_spec=pltpu.PrefetchScalarGridSpec(
            num_scalar_prefetch=0,
            grid=(3, n_ct, B, n_blk),        # weight axes outermost -> weight tiles stay resident
            in_specs=[
                pl.BlockSpec((1, block, d_in), lambda c, j, b, t: (b, t, 0)),
                pl.BlockSpec((1, d_in, ctile), lambda c, j, b, t: (c, 0, j)),
            ],
            out_specs=pl.BlockSpec((1, 1, block, ctile), lambda c, j, b, t: (c, b, t, j)),
        ),
        compiler_params=_compiler_params(("parallel",) * 4),
    )(x, w_stack)

    # ---- flash attention over the flattened causal triangle -------------------
    pairs = [(qi, ki) for qi in range(n_blk) for ki in range(qi + 1)]
    qi_arr = jnp.asarray([p[0] for p in pairs], dtype=jnp.int32)
    ki_arr = jnp.asarray([p[1] for p in pairs], dtype=jnp.int32)
    n_steps = len(pairs)

    flash_kernel = _make_flash_kernel(num_heads, head_dim, block, T, T_pad)
    wo = wo.astype(dtype)
    bo2d = bo.reshape(1, d_out).astype(dtype)

    qkv_blk = (1, 1, block, d_out)
    q_spec = pl.BlockSpec(qkv_blk, lambda b, s, qi_r, ki_r: (0, b, qi_r[s], 0))
    k_spec = pl.BlockSpec(qkv_blk, lambda b, s, qi_r, ki_r: (1, b, ki_r[s], 0))
    v_spec = pl.BlockSpec(qkv_blk, lambda b, s, qi_r, ki_r: (2, b, ki_r[s], 0))

    out = pl.pallas_call(
        flash_kernel,
        out_shape=jax.ShapeDtypeStruct((B, T_pad, d_out), dtype),
        grid_spec=pltpu.PrefetchScalarGridSpec(
            num_scalar_prefetch=2,                     # qi[], ki[] -> SMEM, used in index_maps
            grid=(B, n_steps),
            in_specs=[
                q_spec, k_spec, v_spec,
                pl.BlockSpec((d_out, d_out), lambda b, s, qi_r, ki_r: (0, 0)),
                pl.BlockSpec((1, d_out), lambda b, s, qi_r, ki_r: (0, 0)),
            ],
            out_specs=pl.BlockSpec((1, block, d_out),
                                   lambda b, s, qi_r, ki_r: (b, qi_r[s], 0)),
            scratch_shapes=[
                pltpu.VMEM((num_heads, block, 1), jnp.float32),   # running max per head
                pltpu.VMEM((num_heads, block, 1), jnp.float32),   # running denom per head
                pltpu.VMEM((block, d_out), jnp.float32),          # lane-dense context acc
            ],
        ),
        # TODO(synk): with B == 1 on v7x the single "parallel" axis leaves one TensorCore idle;
        # split the flattened triangle into a leading parallel axis in that regime.
        compiler_params=_compiler_params(("parallel", "arbitrary")),
    )(qi_arr, ki_arr, qkv, qkv, qkv, wo, bo2d)

    if T_pad != T:
        out = out[:, :T, :]
    return out


# ----------------------------------------------------------------------------
# Plain-JAX reference mirroring the PyTorch forward exactly.
# ----------------------------------------------------------------------------
def custom_mha_ref(x, wq, wk, wv, wo, bo, num_heads):
    B, T, d_in = x.shape
    d_out = wq.shape[1]
    hd = d_out // num_heads
    q = (x @ wq).reshape(B, T, num_heads, hd).transpose(0, 2, 1, 3)
    k = (x @ wk).reshape(B, T, num_heads, hd).transpose(0, 2, 1, 3)
    v = (x @ wv).reshape(B, T, num_heads, hd).transpose(0, 2, 1, 3)
    s = jnp.einsum('bhqd,bhkd->bhqk', q, k)
    mask = jnp.triu(jnp.ones((T, T), dtype=bool), k=1)
    s = jnp.where(mask, -jnp.inf, s)
    w = jax.nn.softmax(s / math.sqrt(hd), axis=-1)
    ctx = jnp.einsum('bhqk,bhkd->bhqd', w, v).transpose(0, 2, 1, 3).reshape(B, T, d_out)
    return ctx @ wo + bo


if __name__ == "__main__":
    B, d_in, d_out, num_heads = 2, 32, 32, 4

    key = jax.random.PRNGKey(0)
    kx, kq, kk, kv, ko, kb = jax.random.split(key, 6)
    wq = jax.random.normal(kq, (d_in, d_out), dtype=jnp.float32) * 0.1
    wk = jax.random.normal(kk, (d_in, d_out), dtype=jnp.float32) * 0.1
    wv = jax.random.normal(kv, (d_in, d_out), dtype=jnp.float32) * 0.1
    wo = jax.random.normal(ko, (d_out, d_out), dtype=jnp.float32) * 0.1
    bo = jax.random.normal(kb, (d_out,), dtype=jnp.float32) * 0.1

    # (T=16, block=8): multi-block flattened triangle (off-diagonal + diagonal steps).
    # (T=12, block=8): T-padding with padded-key masking on the last diagonal block.
    for T, blk in ((16, 8), (12, 8)):
        x = jax.random.normal(jax.random.fold_in(kx, T), (B, T, d_in), dtype=jnp.float32)
        out = custom_mha_pallas(x, wq, wk, wv, wo, bo, num_heads, block=blk)
        out = jax.block_until_ready(out)
        ref = custom_mha_ref(x, wq, wk, wv, wo, bo, num_heads)
        assert out.shape == (B, T, d_out)
        # tolerance accounts for the EUP approximate reciprocal in the softmax normalization
        assert jnp.allclose(out, ref, atol=2e-3, rtol=2e-3), f"mismatch vs reference (T={T})"

    print("KERNEL_OK")
</pallas_src>

<mosaic_0001>
module attributes {stable_mosaic.version = 11 : i64} {
  func.func @_qkv_kernel(%arg0: i32, %arg1: i32, %arg2: i32, %arg3: i32, %arg4: memref<1x8x32xf32, #tpu.memory_space<vmem>>, %arg5: memref<1x32x32xf32, #tpu.memory_space<vmem>>, %arg6: memref<1x1x8x32xf32, #tpu.memory_space<vmem>>) attributes {dimension_semantics = [#tpu.dimension_semantics<parallel>, #tpu.dimension_semantics<parallel>, #tpu.dimension_semantics<parallel>, #tpu.dimension_semantics<parallel>], iteration_bounds = array<i64: 3, 1, 2, 2>, scalar_prefetch = 0 : i64, scratch_operands = 0 : i64, tpu.core_type = #tpu.core_type<tc>, window_params = [{transform_indices = @transform_0, window_bounds = array<i64: 1, 8, 32>}, {transform_indices = @transform_1, window_bounds = array<i64: 1, 32, 32>}, {transform_indices = @transform_2, window_bounds = array<i64: 1, 1, 8, 32>}]} {
    %c0 = arith.constant 0 : index
    %c0_0 = arith.constant 0 : index
    %c0_1 = arith.constant 0 : index
    %0 = vector.load %arg4[%c0, %c0_0, %c0_1] : memref<1x8x32xf32, #tpu.memory_space<vmem>>, vector<1x8x32xf32>
    %1 = vector.shape_cast %0 : vector<1x8x32xf32> to vector<8x32xf32>
    %c0_2 = arith.constant 0 : index
    %c0_3 = arith.constant 0 : index
    %c0_4 = arith.constant 0 : index
    %2 = vector.load %arg5[%c0_2, %c0_3, %c0_4] : memref<1x32x32xf32, #tpu.memory_space<vmem>>, vector<1x32x32xf32>
    %3 = vector.shape_cast %2 : vector<1x32x32xf32> to vector<32x32xf32>
    %cst = arith.constant dense<0.000000e+00> : vector<8x32xf32>
    %4 = tpu.matmul %1, %3, %cst {dimension_numbers = #tpu.dot_dimension_numbers<[1], [0], [0], [1], [0, 0, 1, 1], [], []>} : vector<8x32xf32>, vector<32x32xf32>, vector<8x32xf32> -> vector<8x32xf32>
    %c0_5 = arith.constant 0 : index
    %c0_6 = arith.constant 0 : index
    %c0_7 = arith.constant 0 : index
    %c0_8 = arith.constant 0 : index
    %5 = vector.load %arg6[%c0_5, %c0_6, %c0_7, %c0_8] : memref<1x1x8x32xf32, #tpu.memory_space<vmem>>, vector<1x1x8x32xf32>
    %6 = vector.shape_cast %5 : vector<1x1x8x32xf32> to vector<8x32xf32>
    %7 = vector.shape_cast %4 : vector<8x32xf32> to vector<1x1x8x32xf32>
    tpu.vector_store %arg6[%c0_5, %c0_6, %c0_7, %c0_8], %7 {strides = array<i32>} : memref<1x1x8x32xf32, #tpu.memory_space<vmem>>, vector<1x1x8x32xf32>,
    return
  }
  func.func @transform_0(%arg0: i32, %arg1: i32, %arg2: i32, %arg3: i32) -> (i32, i32, i32) {
    %c0_i32 = arith.constant 0 : i32
    %c0_i32_0 = arith.constant 0 : i32
    return %arg2, %arg3, %c0_i32 : i32, i32, i32
  }
  func.func @transform_1(%arg0: i32, %arg1: i32, %arg2: i32, %arg3: i32) -> (i32, i32, i32) {
    %c0_i32 = arith.constant 0 : i32
    %c0_i32_0 = arith.constant 0 : i32
    return %arg0, %c0_i32, %arg1 : i32, i32, i32
  }
  func.func @transform_2(%arg0: i32, %arg1: i32, %arg2: i32, %arg3: i32) -> (i32, i32, i32, i32) {
    %c0_i32 = arith.constant 0 : i32
    return %arg0, %arg2, %arg3, %arg1 : i32, i32, i32, i32
  }
}

</mosaic_0001>

<llo_original>
// kernel: tpu_custom_call.1
$region0: #{tpu_custom_call.1}
  #allocation0 [shape = 'u32[]', space=smem, size = 0x4, offset = 0x4, fixed_abs, tag = 'smem constant byte address 0x4 - core index']
  #allocation1 [shape = 'u32[144,128]{1,0:T(1,128)}', space=vmem, size = 0x12000, scoped, tag = 'internal scratch']
  %s0 = inlined_call_operand.hbm [shape: f32[2,16,32], index: 0, kind: input, shape index: {}]
  %s1 = inlined_call_operand.hbm [shape: f32[3,32,32], index: 1, kind: input, shape index: {}]
  %s2 = inlined_call_operand.hbm [shape: f32[3,2,16,32], index: 2, kind: output, shape index: {}]
  %s3 = sld [smem:[#allocation0]]
  $region49: #{tpu_custom_call.1} parent=0
    _
  %s5 = ssub.s32 1, %s3
  %s6 = scalar_select 0, %s5, %s3
  $region1: #{tpu_custom_call.1} parent=0
    #allocation2 [shape = 'u8[8192]{0}', space=vmem, size = 0x2000, scoped, tag = 'input window, operand 0']
    #allocation3 [shape = 's32[2]{0}', space=sflag, size = 0x8, scoped, tag = 'scoped memory for tpu_custom_call.1']
    #allocation4 [shape = 's32[2]{0}', space=sflag, size = 0x8, scoped, tag = 'scoped memory for tpu_custom_call.1']
    #allocation5 [shape = 'u8[32768]{0}', space=vmem, size = 0x8000, scoped, tag = 'input window, operand 1']
    #allocation6 [shape = 's32[2]{0}', space=sflag, size = 0x8, scoped, tag = 'scoped memory for tpu_custom_call.1']
    #allocation7 [shape = 'u8[8192]{0}', space=vmem, size = 0x2000, scoped, tag = 'output window, operand 0']
    %7 = vsyncpa [#allocation3], 0
    %s8 = scalar_lea.sflag [#allocation3], 1
    %9 = vsyncpa %s8, 0
    %10 = vsyncpa [#allocation6], 0
    %s11 = scalar_lea.sflag [#allocation6], 1
    %12 = vsyncpa %s11, 0
    %13 = vsyncpa [#allocation4], 0
    %s14 = scalar_lea.sflag [#allocation4], 1
    %15 = vsyncpa %s14, 0
    loop: start=0, step=1, limit=14
    $region2: #{tpu_custom_call.1} parent=1 // loop_pre_header
      _
    $region3: #{tpu_custom_call.1} parent=1 // loop_header
      %s17 = sphi 0, %s21
      %p18 = scmp.ge.s32.totalorder %s17, 14
      %s24 = sphi 0, %s50
      %s25 = sphi 0, %s46
      %s26 = sphi 0, %s42
      %s27 = sphi 0, %s38
      %s28 = sphi 0, %s24
      %s29 = sphi 0, %s25
      %s30 = sphi 0, %s26
      %s31 = sphi 0, %s27
      %s32 = sphi 0, %s28
      %s33 = sphi 0, %s29
      %s34 = sphi 0, %s30
      %s35 = sphi 0, %s31
      %s55 = sphi 0, %s57
      %s58 = sphi 0, %s55
      %s59 = sphi 0, %s58
      %s75 = sphi 0, %s59
      %s83 = sphi 0, %s85
      %s86 = sphi 0, %s83
      %s87 = sphi 0, %s86
      %s103 = sphi 0, %s87
      %s115 = sphi 0, %s117
      %s118 = sphi 0, %s115
      %s119 = sphi 0, %s118
      %s135 = sphi 0, %s119
    $region4: #{tpu_custom_call.1} parent=1 // loop_header_branch
      %20 = sbr.rel (%p18) target = $region8
    $region5: #{tpu_custom_call.1} parent=1 // loop_body
      %s22 = ssub.s32 %s17, 1
      %s23 = ssub.s32 %s17, 2
      %s36 = sadd.s32 1, %s27
      %p37 = scmp.ge.s32.totalorder %s36, 2
      %s38 = scalar_select %p37, 0, %s36
      %s39 = sadd.s32 1, %s26
      %s40 = scalar_select %p37, %s39, %s26
      %p41 = scmp.ge.s32.totalorder %s40, 2
      %s42 = scalar_select %p41, 0, %s40
      %s43 = sadd.s32 1, %s25
      %s44 = scalar_select %p41, %s43, %s25
      %p45 = scmp.ge.s32.totalorder %s44, 1
      %s46 = scalar_select %p45, 0, %s44
      %s47 = sadd.s32 1, %s24
      %s48 = scalar_select %p45, %s47, %s24
      %p49 = scmp.ge.s32.totalorder %s48, 3
      %s50 = scalar_select %p49, 0, %s48
      %s51 = ssub.s32 %s26, %s42
      %s52 = ssub.s32 %s27, %s38
      %s53 = sor.u32 %s51, %s52
      %p54 = scmp.eq.s32.totalorder %s53, 0
      %s56 = sadd.s32 %s55, 1
      %s57 = scalar_select %p54, %s55, %s56
      %p60 = pneg %p54
      %p61 = scmp.eq.s32.totalorder %s17, 11
      %p62 = por %p60, %p61
      %p63 = scmp.ne.s32.totalorder %s55, %s58
      %p64 = scmp.eq.s32.totalorder %s17, 0
      %p65 = por %p63, %p64
      %p66 = scmp.ne.s32.totalorder %s55, %s58
      %p67 = scmp.eq.s32.totalorder %s22, 11
      %p68 = por %p66, %p67
      %p69 = scmp.ne.s32.totalorder %s58, %s59
      %p70 = scmp.eq.s32.totalorder %s22, 0
      %p71 = por %p69, %p70
      %p72 = scmp.ne.s32.totalorder %s58, %s59
      %p73 = scmp.eq.s32.totalorder %s23, 11
      %p74 = por %p72, %p73
      %p76 = scmp.ne.s32.totalorder %s59, %s75
      %p77 = scmp.eq.s32.totalorder %s23, 0
      %p78 = por %p76, %p77
      %s79 = ssub.s32 %s24, %s50
      %s80 = ssub.s32 %s25, %s46
      %s81 = sor.u32 %s79, %s80
      %p82 = scmp.eq.s32.totalorder %s81, 0
      %s84 = sadd.s32 %s83, 1
      %s85 = scalar_select %p82, %s83, %s84
      %p88 = pneg %p82
      %p89 = scmp.eq.s32.totalorder %s17, 11
      %p90 = por %p88, %p89
      %p91 = scmp.ne.s32.totalorder %s83, %s86
      %p92 = scmp.eq.s32.totalorder %s17, 0
      %p93 = por %p91, %p92
      %p94 = scmp.ne.s32.totalorder %s83, %s86
      %p95 = scmp.eq.s32.totalorder %s22, 11
      %p96 = por %p94, %p95
      %p97 = scmp.ne.s32.totalorder %s86, %s87
      %p98 = scmp.eq.s32.totalorder %s22, 0
      %p99 = por %p97, %p98
      %p100 = scmp.ne.s32.totalorder %s86, %s87
      %p101 = scmp.eq.s32.totalorder %s23, 11
      %p102 = por %p100, %p101
      %p104 = scmp.ne.s32.totalorder %s87, %s103
      %p105 = scmp.eq.s32.totalorder %s23, 0
      %p106 = por %p104, %p105
      %s107 = ssub.s32 %s24, %s50
      %s108 = ssub.s32 %s26, %s42
      %s109 = sor.u32 %s107, %s108
      %s110 = ssub.s32 %s27, %s38
      %s111 = sor.u32 %s109, %s110
      %s112 = ssub.s32 %s25, %s46
      %s113 = sor.u32 %s111, %s112
      %p114 = scmp.eq.s32.totalorder %s113, 0
      %s116 = sadd.s32 %s115, 1
      %s117 = scalar_select %p114, %s115, %s116
      %p120 = pneg %p114
      %p121 = scmp.eq.s32.totalorder %s17, 11
      %p122 = por %p120, %p121
      %p123 = scmp.ne.s32.totalorder %s115, %s118
      %p124 = scmp.eq.s32.totalorder %s17, 0
      %p125 = por %p123, %p124
      %p126 = scmp.ne.s32.totalorder %s115, %s118
      %p127 = scmp.eq.s32.totalorder %s22, 11
      %p128 = por %p126, %p127
      %p129 = scmp.ne.s32.totalorder %s118, %s119
      %p130 = scmp.eq.s32.totalorder %s22, 0
      %p131 = por %p129, %p130
      %p132 = scmp.ne.s32.totalorder %s118, %s119
      %p133 = scmp.eq.s32.totalorder %s23, 11
      %p134 = por %p132, %p133
      %p136 = scmp.ne.s32.totalorder %s119, %s135
      %p137 = scmp.eq.s32.totalorder %s23, 0
      %p138 = por %p136, %p137
      %p139 = scmp.le.s32.totalorder 1, %s17
      %p140 = scmp.lt.s32.totalorder %s17, 13
      %p141 = pnand %p139, %p140
      %p142 = pneg %p141
      // Predicated region
      $region9: #{tpu_custom_call.1} parent=5 // pred_check
        _
      $region10: #{tpu_custom_call.1} parent=5 // pred_check_branch
        %144 = sbr.rel (%p141) target = $region12
      $region11: #{tpu_custom_call.1} parent=5 // pred_region
        %s145 = ssub.s32 %s17, 1
      $region12: #{tpu_custom_call.1} parent=5 // pred_fallthru
        _
      %p146 = scmp.lt.s32.totalorder %s17, 12
      // Predicated region
      $region13: #{tpu_custom_call.1} parent=5 // pred_check
        %p147 = pneg %p146
      $region14: #{tpu_custom_call.1} parent=5 // pred_check_branch
        %149 = sbr.rel (%p147) target = $region16
      $region15: #{tpu_custom_call.1} parent=5 // pred_region
        // Predicated region
        $region17: #{tpu_custom_call.1} parent=15 // pred_check
          %p150 = pneg %p65
        $region18: #{tpu_custom_call.1} parent=15 // pred_check_branch
          %152 = sbr.rel (%p150) target = $region20
        $region19: #{tpu_custom_call.1} parent=15 // pred_region
          %s153 = sand.u32 %s55, 1
          %s154 = scalar_lea.sflag [#allocation3], %s153
          %s155 = sand.u32 %s55, 1
          %s156 = smul.addr %s155, 8
          %s157 = scalar_lea.vmem [#allocation2], %s156
          %s159 = ssub.s32 128, 128
          %160 = vsyncadd %s154, %s159
          %s161 = smul.addr %s26, 2
          %s162 = sadd.s32 %s27, %s161
          %s163 = smul.addr %s162, 128
          %s164 = scalar_lea.hbm %s0, %s163
          %s166 = sshll.u32 %s157, 4
          %s167 = int_to_ptr.vmem [resolvable:$true] %s166
          %169 = dma.hbm_to_vmem [thread:$0]  %s164, 128, %s167, %s154
        $region20: #{tpu_custom_call.1} parent=15 // pred_fallthru
          _
        // Predicated region
        $region21: #{tpu_custom_call.1} parent=15 // pred_check
          %p170 = pneg %p93
        $region22: #{tpu_custom_call.1} parent=15 // pred_check_branch
          %172 = sbr.rel (%p170) target = $region24
        $region23: #{tpu_custom_call.1} parent=15 // pred_region
          %s173 = sand.u32 %s83, 1
          %s174 = scalar_lea.sflag [#allocation6], %s173
          %s175 = sand.u32 %s83, 1
          %s176 = smul.addr %s175, 32
          %s177 = scalar_lea.vmem [#allocation5], %s176
          %s179 = ssub.s32 512, 512
          %180 = vsyncadd %s174, %s179
          %s181 = smul.addr %s24, 4
          %s182 = sadd.s32 %s25, %s181
          %s183 = smul.addr %s182, 128
          %s184 = scalar_lea.hbm %s1, %s183
          %s185 = sshll.u32 %s177, 4
          %s186 = int_to_ptr.vmem [resolvable:$true] %s185
          %191 = dma.hbm_to_vmem [thread:$0]  %s184, 512, %s186, %s174, 128, 128, 8
        $region24: #{tpu_custom_call.1} parent=15 // pred_fallthru
          _
      $region16: #{tpu_custom_call.1} parent=5 // pred_fallthru
        _
      %p192 = scmp.le.s32.totalorder 1, %s17
      %p193 = scmp.lt.s32.totalorder %s17, 13
      %p194 = pnand %p192, %p193
      %p195 = pneg %p194
      // Predicated region
      $region25: #{tpu_custom_call.1} parent=5 // pred_check
        _
      $region26: #{tpu_custom_call.1} parent=5 // pred_check_branch
        %197 = sbr.rel (%p194) target = $region28
      $region27: #{tpu_custom_call.1} parent=5 // pred_region
        %s198 = ssub.s32 %s17, 1
        %s199 = sand.u32 %s58, 1
        %s200 = scalar_lea.sflag [#allocation3], %s199
        %s201 = sand.u32 %s58, 1
        %s202 = smul.addr %s201, 8
        %s203 = scalar_lea.vmem [#allocation2], %s202
        // Predicated region
        $region29: #{tpu_custom_call.1} parent=27 // pred_check
          %p204 = pneg %p71
        $region30: #{tpu_custom_call.1} parent=27 // pred_check_branch
          %206 = sbr.rel (%p204) target = $region32
        $region31: #{tpu_custom_call.1} parent=27 // pred_region
          %207 = dma.done %s200, 128
        $region32: #{tpu_custom_call.1} parent=27 // pred_fallthru
          _
        %s208 = sand.u32 %s86, 1
        %s209 = scalar_lea.sflag [#allocation6], %s208
        %s210 = sand.u32 %s86, 1
        %s211 = smul.addr %s210, 32
        %s212 = scalar_lea.vmem [#allocation5], %s211
        // Predicated region
        $region33: #{tpu_custom_call.1} parent=27 // pred_check
          %p213 = pneg %p99
        $region34: #{tpu_custom_call.1} parent=27 // pred_check_branch
          %215 = sbr.rel (%p213) target = $region36
        $region35: #{tpu_custom_call.1} parent=27 // pred_region
          %216 = dma.done %s209, 512
        $region36: #{tpu_custom_call.1} parent=27 // pred_fallthru
          _
        %s217 = sand.u32 %s58, 1
        %s218 = scalar_lea.sflag [#allocation3], %s217
        %s219 = sand.u32 %s58, 1
        %s220 = smul.addr %s219, 8
        %s221 = scalar_lea.vmem [#allocation2], %s220
        %p222 = pneg %p71
        %p223 = pneg %p68
        %s224 = sand.u32 %s86, 1
        %s225 = scalar_lea.sflag [#allocation6], %s224
        %s226 = sand.u32 %s86, 1
        %s227 = smul.addr %s226, 32
        %s228 = scalar_lea.vmem [#allocation5], %s227
        %p229 = pneg %p99
        %p230 = pneg %p96
        %p231 = pneg %p131
        %p232 = pneg %p128
        %s233 = sand.u32 %s118, 1
        %s234 = scalar_lea.sflag [#allocation4], %s233
        %s235 = sand.u32 %s118, 1
        %s236 = smul.addr %s235, 8
        %s237 = scalar_lea.vmem [#allocation7], %s236
        %v238 = vld [vmem:[%s203] sm:$0xff]
        %v239 = vld [vmem:[%s212] sm:$0xff]
        %v240 = vld [vmem:[%s212 + $0x8] sm:$0xff]
        %v241 = vld [vmem:[%s212 + $0x10] sm:$0xff]
        %v242 = vld [vmem:[%s212 + $0x18] sm:$0xff]
        %vm243 = vcmask 261120
        %v245 = vsel %vm243, %v238, 0
        %247 = vmatprep.subr.mxu0 0.0
        %248 = vmatpush1.msra.mxu0 %v239
        %249 = vmatprep.subr.mxu0 0.0
        %250 = vmatpush1.msra.mxu0 %v240
        %251 = vmatprep.subr.mxu0 0.0
        %252 = vmatpush1.msra.mxu0 %v241
        %253 = vmatprep.subr.mxu0 0.0
        %254 = vmatpush1.msra.mxu0 %v242
        %255 = vmatprep.subr.mxu0 0.0
        %256 = vmatpush1.msra.mxu0 0.0
        %257 = vmatprep.subr.mxu0 0.0
        %258 = vmatpush1.msra.mxu0 0.0
        %259 = vmatprep.subr.mxu0 0.0
        %260 = vmatpush1.msra.mxu0 0.0
        %261 = vmatprep.subr.mxu0 0.0
        %262 = vmatpush1.msra.mxu0 0.0
        %263 = vmatprep.subr.mxu0 0.0
        %264 = vmatpush1.msra.mxu0 0.0
        %265 = vmatprep.subr.mxu0 0.0
        %266 = vmatpush1.msra.mxu0 0.0
        %267 = vmatprep.subr.mxu0 0.0
        %268 = vmatpush1.msra.mxu0 0.0
        %269 = vmatprep.subr.mxu0 0.0
        %270 = vmatpush1.msra.mxu0 0.0
        %271 = vmatprep.subr.mxu0 0.0
        %272 = vmatpush1.msra.mxu0 0.0
        %273 = vmatprep.subr.mxu0 0.0
        %274 = vmatpush1.msra.mxu0 0.0
        %275 = vmatprep.subr.mxu0 0.0
        %276 = vmatpush1.msra.mxu0 0.0
        %277 = vmatprep.subr.mxu0 0.0
        %278 = vmatpush1.msra.mxu0 0.0
        %279 = vmatprep.subr.mxu0 0.0
        %280 = vmatpush1.msra.mxu0 0.0
        %281 = vmatprep.subr.mxu0 0.0
        %282 = vmatpush1.msra.mxu0 0.0
        %283 = vmatprep.subr.mxu0 0.0
        %284 = vmatpush1.msra.mxu0 0.0
        %285 = vmatprep.subr.mxu0 0.0
        %286 = vmatpush1.msra.mxu0 0.0
        %287 = vmatprep.subr.mxu0 0.0
        %288 = vmatpush1.msra.mxu0 0.0
        %289 = vmatprep.subr.mxu0 0.0
        %290 = vmatpush1.msra.mxu0 0.0
        %291 = vmatprep.subr.mxu0 0.0
        %292 = vmatpush1.msra.mxu0 0.0
        %293 = vmatprep.subr.mxu0 0.0
        %294 = vmatpush1.msra.mxu0 0.0
        %295 = vmatprep.subr.mxu0 0.0
        %296 = vmatpush1.msra.mxu0 0.0
        %297 = vmatprep.subr.mxu0 0.0
        %298 = vmatpush1.msra.mxu0 0.0
        %299 = vmatprep.subr.mxu0 0.0
        %300 = vmatpush1.msra.mxu0 0.0
        %301 = vmatprep.subr.mxu0 0.0
        %302 = vmatpush1.msra.mxu0 0.0
        %303 = vmatprep.subr.mxu0 0.0
        %304 = vmatpush1.msra.mxu0 0.0
        %305 = vmatprep.subr.mxu0 0.0
        %306 = vmatpush1.msra.mxu0 0.0
        %307 = vmatprep.subr.mxu0 0.0
        %308 = vmatpush1.msra.mxu0 0.0
        %309 = vmatprep.subr.mxu0 0.0
        %310 = vmatpush1.msra.mxu0 0.0
        %311 = vmatprep.mubr.f32.mxu0 0.0
        %312 = vmatmul.mubr.f32.gmra.mrb[0].mxu0 %v245
        %v313 = vpop.f32.mrb[0].mxu0
        %v314 = vadd.f32 0.0, %v313
        %v315 = vpop.f32.mrb[0].mxu0
        %316 = vdwg.mxu0
        %317 = vst.msk [vmem:[%s237] sm:$0xff] %vm243, %v314
        %s318 = sand.u32 %s118, 1
        %s319 = scalar_lea.sflag [#allocation4], %s318
        %s320 = sand.u32 %s118, 1
        %s321 = smul.addr %s320, 8
        %s322 = scalar_lea.vmem [#allocation7], %s321
        // Predicated region
        $region37: #{tpu_custom_call.1} parent=27 // pred_check
          %p323 = pneg %p128
        $region38: #{tpu_custom_call.1} parent=27 // pred_check_branch
          %325 = sbr.rel (%p323) target = $region40
        $region39: #{tpu_custom_call.1} parent=27 // pred_region
          %s327 = ssub.s32 128, 128
          %328 = vsyncadd %s319, %s327
          %s329 = sadd.s32 %s29, %s31
          %s330 = smul.addr %s30, 2
          %s331 = sadd.s32 %s329, %s330
          %s332 = smul.addr %s28, 4
          %s333 = sadd.s32 %s331, %s332
          %s334 = smul.addr %s333, 128
          %s335 = scalar_lea.hbm %s2, %s334
          %s337 = sshll.u32 %s322, 4
          %s338 = int_to_ptr.vmem [resolvable:$true] %s337
          %340 = dma.vmem_to_hbm [thread:$0]  %s338, 128, %s335, %s319
        $region40: #{tpu_custom_call.1} parent=27 // pred_fallthru
          _
      $region28: #{tpu_custom_call.1} parent=5 // pred_fallthru
        _
      %p341 = scmp.le.s32.totalorder 2, %s17
      // Predicated region
      $region41: #{tpu_custom_call.1} parent=5 // pred_check
        %p342 = pneg %p341
      $region42: #{tpu_custom_call.1} parent=5 // pred_check_branch
        %344 = sbr.rel (%p342) target = $region44
      $region43: #{tpu_custom_call.1} parent=5 // pred_region
        %s345 = ssub.s32 %s17, 2
        // Predicated region
        $region45: #{tpu_custom_call.1} parent=43 // pred_check
          %p346 = pneg %p134
        $region46: #{tpu_custom_call.1} parent=43 // pred_check_branch
          %348 = sbr.rel (%p346) target = $region48
        $region47: #{tpu_custom_call.1} parent=43 // pred_region
          %s349 = sand.u32 %s119, 1
          %s350 = scalar_lea.sflag [#allocation4], %s349
          %s351 = sand.u32 %s119, 1
          %s352 = smul.addr %s351, 8
          %s353 = scalar_lea.vmem [#allocation7], %s352
          %354 = dma.done %s350, 128
        $region48: #{tpu_custom_call.1} parent=43 // pred_fallthru
          _
      $region44: #{tpu_custom_call.1} parent=5 // pred_fallthru
        _
    $region6: #{tpu_custom_call.1} parent=1 // loop_footer
      %s21 = sadd.s32 1, %s17
    $region7: #{tpu_custom_call.1} parent=1 // loop_footer_branch
      %16 = sbr.rel target = $region3
    $region8: #{tpu_custom_call.1} parent=1 // loop_exit
      _
    %355 = vsyncpa [#allocation3], 1
    %s356 = scalar_lea.sflag [#allocation3], 1
    %357 = vsyncpa %s356, 1
    %358 = vsyncpa [#allocation6], 1
    %s359 = scalar_lea.sflag [#allocation6], 1
    %360 = vsyncpa %s359, 1
    %361 = vsyncpa [#allocation4], 1
    %s362 = scalar_lea.sflag [#allocation4], 1
    %363 = vsyncpa %s362, 1

</llo_original>
